<compile_context>
chip_gen: v7x
topology: tpu7x:2x2x1
jax: 0.10.0
libtpu: 0.0.40
codegen_flags: <defaults>
</compile_context>

<pallas_src>
import functools

import jax
import jax.numpy as jnp
from jax.experimental import pallas as pl
from jax.experimental.pallas import tpu as pltpu


def _contrastive_kernel(x0_ref, x1_ref, y_ref, out_ref, acc_ref, *,
                        margin, n_rows, tile_n, tiles_per_core):
    c = pl.program_id(0)          # megacore (parallel) axis
    k = pl.program_id(1)          # tile (reduction) axis

    @pl.when(k == 0)
    def _():
        acc_ref[...] = jnp.zeros_like(acc_ref)

    # Cast to f32 after the load — inputs travel HBM->VMEM in native dtype.
    x0 = x0_ref[...].astype(jnp.float32)
    x1 = x1_ref[...].astype(jnp.float32)
    diff = x0 - x1
    dist_sq = jnp.sum(diff * diff, axis=1, keepdims=True)           # (tile_n, 1)

    # TODO(synk): the PyTorch forward does `print(dist_sq)` (debug I/O only);
    # omitted here since it does not affect the returned loss.
    dist = jnp.sqrt(dist_sq)
    clamped = jnp.maximum(margin - dist, 0.0)                        # (tile_n, 1)

    y = y_ref[...].astype(jnp.float32)                               # (tile_n, 1)
    per_sample = y * dist_sq + (1.0 - y) * (clamped * clamped)       # (tile_n, 1)

    # Mask rows outside the real array: covers (a) the padded rows of the
    # final partial tile and (b) duplicate steps created by clamping the
    # block index map.  Cost is negligible (a (tile_n,1) iota + select).
    linear_tile = c * tiles_per_core + k
    row_ids = linear_tile * tile_n + jax.lax.broadcasted_iota(
        jnp.int32, per_sample.shape, 0)
    per_sample = jnp.where(row_ids < n_rows, per_sample, 0.0)

    acc_ref[...] += jnp.sum(per_sample, keepdims=True)               # (1, 1)

    @pl.when(k == pl.num_programs(1) - 1)
    def _():
        # Flush this core's partial sum to its own lane-dense output block.
        out_ref[...] = jnp.broadcast_to(acc_ref[...], out_ref.shape)


def _pick_tile_n(n, d, x_itemsize):
    # ~12 MiB of double-buffered input blocks keeps us comfortably inside the
    # 32 MiB VMEM limit on every generation while giving multi-MiB DMAs.
    budget = 12 * 1024 * 1024
    # 2 inputs x 2 pipeline buffers in native dtype, plus the (tile_n, 1)
    # label block which pads to 128 lanes in VMEM (conservatively 512 B/row/buf).
    per_row = 2 * 2 * d * x_itemsize + 2 * 128 * 4
    tile = budget // max(per_row, 1)
    if tile >= n:
        return n                               # single tile covers everything
    return max(8, (tile // 8) * 8)             # sublane-aligned tiling


def contrastive_loss(x0, x1, y, margin=1.0, *, tile_n=None):
    """Pallas-TPU contrastive loss matching the PyTorch reference semantics."""
    assert x0.shape == x1.shape
    assert x0.ndim == 2 and x1.ndim == 2 and y.ndim == 1
    assert x1.shape[0] == y.shape[0] and x1.shape[0] > 0

    n, d = x0.shape
    y2d = y.reshape(n, 1)

    x_itemsize = jnp.dtype(x0.dtype).itemsize
    y_itemsize = jnp.dtype(y.dtype).itemsize
    if tile_n is None:
        tile_n = _pick_tile_n(n, d, x_itemsize)
    tile_n = min(int(tile_n), n)
    if tile_n < n:
        tile_n = max(8, (tile_n // 8) * 8)

    t_total = pl.cdiv(n, tile_n)
    # Size-2 parallel axis => v7x megacore splits the rows across both
    # TensorCores; on v5e/v6e it is a plain outer loop (same total steps).
    num_cores = 1 if t_total < 2 else 2
    tiles_per_core = pl.cdiv(t_total, num_cores)

    def blk_index(c, k):
        # Clamp so every block window is in-bounds; duplicate (clamped) steps
        # are zeroed by the in-kernel row mask.
        return (jnp.minimum(c * tiles_per_core + k, t_total - 1), 0)

    kernel = functools.partial(
        _contrastive_kernel, margin=float(margin), n_rows=n,
        tile_n=tile_n, tiles_per_core=tiles_per_core)

    cost = pl.CostEstimate(
        flops=3 * n * d + 8 * n,
        transcendentals=n,
        bytes_accessed=2 * n * d * x_itemsize + n * y_itemsize
        + num_cores * 8 * 128 * 4,
    )

    out = pl.pallas_call(
        kernel,
        out_shape=jax.ShapeDtypeStruct((num_cores * 8, 128), jnp.float32),
        grid=(num_cores, tiles_per_core),
        in_specs=[
            pl.BlockSpec((tile_n, d), blk_index),
            pl.BlockSpec((tile_n, d), blk_index),
            pl.BlockSpec((tile_n, 1), blk_index),
        ],
        out_specs=pl.BlockSpec((8, 128), lambda c, k: (c, 0)),
        scratch_shapes=[pltpu.VMEM((1, 1), jnp.float32)],
        compiler_params=pltpu.CompilerParams(
            dimension_semantics=("parallel", "arbitrary"),
            vmem_limit_bytes=32 * 1024 * 1024),
        cost_estimate=cost,
    )(x0, x1, y2d)

    partials = out[::8, 0]                     # one running sum per core
    return jnp.sum(partials) / 2.0 / float(n)


def _reference(x0, x1, y, margin=1.0):
    diff = x0.astype(jnp.float32) - x1.astype(jnp.float32)
    dist_sq = jnp.sum(diff * diff, axis=1)
    dist = jnp.sqrt(dist_sq)
    mdist = margin - dist
    dist_c = jnp.maximum(mdist, 0.0)
    loss = y * dist_sq + (1.0 - y) * dist_c * dist_c
    return jnp.sum(loss) / 2.0 / x0.shape[0]


if __name__ == "__main__":
    key = jax.random.PRNGKey(0)
    k0, k1, k2, k3, k4, k5 = jax.random.split(key, 6)

    # Small case consistent with the module spec (2-D x0/x1, 1-D y).
    N, D = 8, 32
    x0 = jax.random.normal(k0, (N, D), dtype=jnp.float32)
    x1 = jax.random.normal(k1, (N, D), dtype=jnp.float32)
    y = jax.random.bernoulli(k2, 0.5, (N,)).astype(jnp.float32)

    loss = contrastive_loss(x0, x1, y, margin=1.0)
    jax.block_until_ready(loss)
    ref = _reference(x0, x1, y, margin=1.0)
    assert jnp.allclose(loss, ref, rtol=1e-5, atol=1e-5), (loss, ref)

    # Larger case.  Force small tiles to exercise the 2-D (core, tile) grid,
    # the partial final tile and the clamped duplicate step.
    N2, D2 = 2056, 128
    x0b = jax.random.normal(k3, (N2, D2), dtype=jnp.float32)
    x1b = jax.random.normal(k4, (N2, D2), dtype=jnp.float32)
    yb = jax.random.bernoulli(k5, 0.5, (N2,)).astype(jnp.float32)

    ref_b = _reference(x0b, x1b, yb, margin=1.0)

    loss_b = contrastive_loss(x0b, x1b, yb, margin=1.0, tile_n=256)
    jax.block_until_ready(loss_b)
    assert jnp.allclose(loss_b, ref_b, rtol=1e-4, atol=1e-4), (loss_b, ref_b)

    # Same case with the default (auto-sized) tiling.
    loss_c = contrastive_loss(x0b, x1b, yb, margin=1.0)
    jax.block_until_ready(loss_c)
    assert jnp.allclose(loss_c, ref_b, rtol=1e-4, atol=1e-4), (loss_c, ref_b)

    print("KERNEL_OK")
</pallas_src>

<mosaic_0001>
module attributes {stable_mosaic.version = 11 : i64} {
  func.func @_contrastive_kernel(%arg0: i32, %arg1: i32, %arg2: memref<8x32xf32, #tpu.memory_space<vmem>>, %arg3: memref<8x32xf32, #tpu.memory_space<vmem>>, %arg4: memref<8x1xf32, #tpu.memory_space<vmem>>, %arg5: memref<8x128xf32, #tpu.memory_space<vmem>>, %arg6: memref<1x1xf32, #tpu.memory_space<vmem>>) attributes {dimension_semantics = [#tpu.dimension_semantics<parallel>, #tpu.dimension_semantics<arbitrary>], iteration_bounds = array<i64: 1, 1>, scalar_prefetch = 0 : i64, scratch_operands = 1 : i64, tpu.core_type = #tpu.core_type<tc>, window_params = [{transform_indices = @transform_0, window_bounds = array<i64: 8, 32>}, {transform_indices = @transform_1, window_bounds = array<i64: 8, 32>}, {transform_indices = @transform_2, window_bounds = array<i64: 8, 1>}, {transform_indices = @transform_3, window_bounds = array<i64: 8, 128>}]} {
    %c0_i32 = arith.constant 0 : i32
    %0 = arith.cmpi eq, %arg1, %c0_i32 : i32
    %1 = arith.extui %0 : i1 to i32
    %c0_i32_0 = arith.constant 0 : i32
    %2 = arith.cmpi ne, %1, %c0_i32_0 : i32
    scf.if %2 {
      %cst_18 = arith.constant 0.000000e+00 : f32
      %42 = vector.broadcast %cst_18 : f32 to vector<1x1xf32>
      %c0_19 = arith.constant 0 : index
      %c0_20 = arith.constant 0 : index
      %43 = vector.load %arg6[%c0_19, %c0_20] : memref<1x1xf32, #tpu.memory_space<vmem>>, vector<1x1xf32>
      tpu.vector_store %arg6[%c0_19, %c0_20], %42 {strides = array<i32>} : memref<1x1xf32, #tpu.memory_space<vmem>>, vector<1x1xf32>,
    } else {
    }
    %c0 = arith.constant 0 : index
    %c0_1 = arith.constant 0 : index
    %3 = vector.load %arg2[%c0, %c0_1] : memref<8x32xf32, #tpu.memory_space<vmem>>, vector<8x32xf32>
    %c0_2 = arith.constant 0 : index
    %c0_3 = arith.constant 0 : index
    %4 = vector.load %arg3[%c0_2, %c0_3] : memref<8x32xf32, #tpu.memory_space<vmem>>, vector<8x32xf32>
    %5 = arith.subf %3, %4 : vector<8x32xf32>
    %6 = arith.mulf %5, %5 : vector<8x32xf32>
    %cst = arith.constant dense<0.000000e+00> : vector<8xf32>
    %7 = vector.multi_reduction <add>, %6, %cst [1] : vector<8x32xf32> to vector<8xf32>
    %8 = vector.shape_cast %7 : vector<8xf32> to vector<8x1xf32>
    %9 = math.sqrt %8 : vector<8x1xf32>
    %cst_4 = arith.constant 1.000000e+00 : f32
    %10 = vector.broadcast %cst_4 : f32 to vector<8x1xf32>
    %11 = arith.subf %10, %9 : vector<8x1xf32>
    %cst_5 = arith.constant 0.000000e+00 : f32
    %12 = vector.broadcast %cst_5 : f32 to vector<8x1xf32>
    %13 = arith.maximumf %11, %12 : vector<8x1xf32>
    %c0_6 = arith.constant 0 : index
    %c0_7 = arith.constant 0 : index
    %14 = vector.load %arg4[%c0_6, %c0_7] : memref<8x1xf32, #tpu.memory_space<vmem>>, vector<8x1xf32>
    %15 = arith.mulf %14, %8 : vector<8x1xf32>
    %cst_8 = arith.constant 1.000000e+00 : f32
    %16 = vector.broadcast %cst_8 : f32 to vector<8x1xf32>
    %17 = arith.subf %16, %14 : vector<8x1xf32>
    %18 = arith.mulf %13, %13 : vector<8x1xf32>
    %19 = arith.mulf %17, %18 : vector<8x1xf32>
    %20 = arith.addf %15, %19 : vector<8x1xf32>
    %c1_i32 = arith.constant 1 : i32
    %21 = arith.muli %arg0, %c1_i32 : i32
    %22 = arith.addi %21, %arg1 : i32
    %c8_i32 = arith.constant 8 : i32
    %23 = arith.muli %22, %c8_i32 : i32
    %24 = tpu.iota {dimensions = array<i32: 0>} : vector<8x1xi32>
    %25 = vector.broadcast %23 : i32 to vector<8x1xi32>
    %26 = arith.addi %25, %24 : vector<8x1xi32>
    %c8_i32_9 = arith.constant 8 : i32
    %27 = vector.broadcast %c8_i32_9 : i32 to vector<8x1xi32>
    %28 = arith.cmpi slt, %26, %27 : vector<8x1xi32>
    %cst_10 = arith.constant 0.000000e+00 : f32
    %29 = vector.broadcast %cst_10 : f32 to vector<8x1xf32>
    %30 = arith.select %28, %20, %29 : vector<8x1xi1>, vector<8x1xf32>
    %c0_11 = arith.constant 0 : index
    %c0_12 = arith.constant 0 : index
    %31 = vector.load %arg6[%c0_11, %c0_12] : memref<1x1xf32, #tpu.memory_space<vmem>>, vector<1x1xf32>
    %32 = vector.shape_cast %30 : vector<8x1xf32> to vector<1x8x1xf32>
    %cst_13 = arith.constant dense<0.000000e+00> : vector<1xf32>
    %33 = vector.multi_reduction <add>, %32, %cst_13 [1, 2] : vector<1x8x1xf32> to vector<1xf32>
    %34 = vector.shape_cast %33 : vector<1xf32> to vector<1x1x1xf32>
    %35 = vector.extract %34[0, 0, 0] : f32 from vector<1x1x1xf32>
    %36 = vector.broadcast %35 : f32 to vector<1x1xf32>
    %37 = arith.addf %31, %36 : vector<1x1xf32>
    %c0_14 = arith.constant 0 : index
    %c0_15 = arith.constant 0 : index
    %38 = vector.load %arg6[%c0_14, %c0_15] : memref<1x1xf32, #tpu.memory_space<vmem>>, vector<1x1xf32>
    tpu.vector_store %arg6[%c0_14, %c0_15], %37 {strides = array<i32>} : memref<1x1xf32, #tpu.memory_space<vmem>>, vector<1x1xf32>,
    %c0_i32_16 = arith.constant 0 : i32
    %39 = arith.cmpi eq, %arg1, %c0_i32_16 : i32
    %40 = arith.extui %39 : i1 to i32
    %c0_i32_17 = arith.constant 0 : i32
    %41 = arith.cmpi ne, %40, %c0_i32_17 : i32
    scf.if %41 {
      %c0_18 = arith.constant 0 : index
      %c0_19 = arith.constant 0 : index
      %42 = vector.load %arg6[%c0_18, %c0_19] : memref<1x1xf32, #tpu.memory_space<vmem>>, vector<1x1xf32>
      %43 = vector.shape_cast %42 : vector<1x1xf32> to vector<1x1xf32>
      %44 = vector.broadcast %43 : vector<1x1xf32> to vector<8x128xf32>
      %c0_20 = arith.constant 0 : index
      %c0_21 = arith.constant 0 : index
      %45 = vector.load %arg5[%c0_20, %c0_21] : memref<8x128xf32, #tpu.memory_space<vmem>>, vector<8x128xf32>
      tpu.vector_store %arg5[%c0_20, %c0_21], %44 {strides = array<i32>} : memref<8x128xf32, #tpu.memory_space<vmem>>, vector<8x128xf32>,
    } else {
    }
    return
  }
  func.func @transform_0(%arg0: i32, %arg1: i32) -> (i32, i32) {
    %c1_i32 = arith.constant 1 : i32
    %0 = arith.muli %arg0, %c1_i32 : i32
    %1 = arith.addi %0, %arg1 : i32
    %c0_i32 = arith.constant 0 : i32
    %2 = arith.minsi %1, %c0_i32 : i32
    %c0_i32_0 = arith.constant 0 : i32
    %c0_i32_1 = arith.constant 0 : i32
    return %2, %c0_i32_0 : i32, i32
  }
  func.func @transform_1(%arg0: i32, %arg1: i32) -> (i32, i32) {
    %c1_i32 = arith.constant 1 : i32
    %0 = arith.muli %arg0, %c1_i32 : i32
    %1 = arith.addi %0, %arg1 : i32
    %c0_i32 = arith.constant 0 : i32
    %2 = arith.minsi %1, %c0_i32 : i32
    %c0_i32_0 = arith.constant 0 : i32
    %c0_i32_1 = arith.constant 0 : i32
    return %2, %c0_i32_0 : i32, i32
  }
  func.func @transform_2(%arg0: i32, %arg1: i32) -> (i32, i32) {
    %c1_i32 = arith.constant 1 : i32
    %0 = arith.muli %arg0, %c1_i32 : i32
    %1 = arith.addi %0, %arg1 : i32
    %c0_i32 = arith.constant 0 : i32
    %2 = arith.minsi %1, %c0_i32 : i32
    %c0_i32_0 = arith.constant 0 : i32
    %c0_i32_1 = arith.constant 0 : i32
    return %2, %c0_i32_0 : i32, i32
  }
  func.func @transform_3(%arg0: i32, %arg1: i32) -> (i32, i32) {
    %c0_i32 = arith.constant 0 : i32
    %c0_i32_0 = arith.constant 0 : i32
    return %arg0, %c0_i32 : i32, i32
  }
}

</mosaic_0001>

<llo_original>
// kernel: tpu_custom_call.1
$region0: #{tpu_custom_call.1}
  #allocation0 [shape = 'u32[]', space=smem, size = 0x4, offset = 0x4, fixed_abs, tag = 'smem constant byte address 0x4 - core index']
  #allocation1 [shape = 'u32[144,128]{1,0:T(1,128)}', space=vmem, size = 0x12000, scoped, tag = 'internal scratch']
  #allocation2 [shape = 'f32[1,1]{1,0:T(1,128)}', space=vmem, size = 0x200, scoped, tag = 'scratch operand']
  %s0 = inlined_call_operand.vmem [shape: f32[8,32], index: 0, kind: input, shape index: {}]
  %s1 = inlined_call_operand.hbm [shape: f32[8,32], index: 1, kind: input, shape index: {}]
  %s2 = inlined_call_operand.vmem [shape: f32[8,1], index: 2, kind: input, shape index: {}]
  %s3 = inlined_call_operand.hbm [shape: f32[8,128], index: 3, kind: output, shape index: {}]
  %s4 = sld [smem:[#allocation0]]
  $region34: #{tpu_custom_call.1} parent=0
    _
  %s6 = ssub.s32 1, %s4
  %s7 = scalar_select 0, %s6, %s4
  $region1: #{tpu_custom_call.1} parent=0
    #allocation3 [shape = 'u8[4096]{0}', space=vmem, size = 0x1000, scoped, tag = 'input window, operand 1, single buffered']
    #allocation4 [shape = 's32[1]{0}', space=sflag, size = 0x4, scoped, tag = 'scoped memory for tpu_custom_call.1']
    #allocation5 [shape = 's32[1]{0}', space=sflag, size = 0x4, scoped, tag = 'scoped memory for tpu_custom_call.1']
    #allocation6 [shape = 'u8[4096]{0}', space=vmem, size = 0x1000, scoped, tag = 'output window, operand 0, single buffered']
    %8 = vsyncpa [#allocation4], 0
    %9 = vsyncpa [#allocation5], 0
    // Predicated region
    $region2: #{tpu_custom_call.1} parent=1 // pred_check
      _
    $region3: #{tpu_custom_call.1} parent=1 // pred_check_branch
      %11 = sbr.rel (0) target = $region5
    $region4: #{tpu_custom_call.1} parent=1 // pred_region
      %s12 = sadd.s32 0, 0
      %p13 = scmp.lt.s32.totalorder %s12, 0
      %s14 = scalar_select %p13, %s12, 0
      %p15 = scmp.lt.s32.totalorder %s14, 0
      %s16 = scalar_select %p15, %s14, 0
      %s17 = smul.addr %s16, 8
      %s18 = scalar_lea.vmem %s0, %s17
      %s19 = sadd.s32 0, 0
      %p20 = scmp.lt.s32.totalorder %s19, 0
      %s21 = scalar_select %p20, %s19, 0
    $region5: #{tpu_custom_call.1} parent=1 // pred_fallthru
      _
    // Predicated region
    $region6: #{tpu_custom_call.1} parent=1 // pred_check
      _
    $region7: #{tpu_custom_call.1} parent=1 // pred_check_branch
      %23 = sbr.rel (0) target = $region9
    $region8: #{tpu_custom_call.1} parent=1 // pred_region
      %s24 = sadd.s32 0, 0
      %p25 = scmp.lt.s32.totalorder %s24, 0
      %s26 = scalar_select %p25, %s24, 0
      %s28 = ssub.s32 128, 128
      %29 = vsyncadd [#allocation4], %s28
      %s30 = smul.addr %s26, 128
      %s31 = scalar_lea.hbm %s1, %s30
      %s33 = sshll.u32 [#allocation3], 4
      %s34 = int_to_ptr.vmem [resolvable:$true] %s33
      %36 = dma.hbm_to_vmem [thread:$0]  %s31, 128, %s34, [#allocation4]
    $region9: #{tpu_custom_call.1} parent=1 // pred_fallthru
      _
    // Predicated region
    $region10: #{tpu_custom_call.1} parent=1 // pred_check
      _
    $region11: #{tpu_custom_call.1} parent=1 // pred_check_branch
      %38 = sbr.rel (0) target = $region13
    $region12: #{tpu_custom_call.1} parent=1 // pred_region
      %s39 = sadd.s32 0, 0
      %p40 = scmp.lt.s32.totalorder %s39, 0
      %s41 = scalar_select %p40, %s39, 0
      %p42 = scmp.lt.s32.totalorder %s41, 0
      %s43 = scalar_select %p42, %s41, 0
      %s44 = smul.addr %s43, 8
      %s45 = scalar_lea.vmem %s2, %s44
      %s46 = sadd.s32 0, 0
      %p47 = scmp.lt.s32.totalorder %s46, 0
      %s48 = scalar_select %p47, %s46, 0
    $region13: #{tpu_custom_call.1} parent=1 // pred_fallthru
      _
    // Predicated region
    $region14: #{tpu_custom_call.1} parent=1 // pred_check
      _
    $region15: #{tpu_custom_call.1} parent=1 // pred_check_branch
      %50 = sbr.rel (0) target = $region17
    $region16: #{tpu_custom_call.1} parent=1 // pred_region
      %51 = dma.done [#allocation4], 128
    $region17: #{tpu_custom_call.1} parent=1 // pred_fallthru
      _
    %s52 = sadd.s32 0, 0
    %p53 = scmp.lt.s32.totalorder %s52, 0
    %s54 = scalar_select %p53, %s52, 0
    %p55 = scmp.lt.s32.totalorder %s54, 0
    %s56 = scalar_select %p55, %s54, 0
    %s57 = smul.addr %s56, 8
    %s58 = scalar_lea.vmem %s0, %s57
    %s59 = sadd.s32 0, 0
    %p60 = scmp.lt.s32.totalorder %s59, 0
    %s61 = scalar_select %p60, %s59, 0
    %p62 = scmp.lt.s32.totalorder %s61, 0
    %s63 = scalar_select %p62, %s61, 0
    %s64 = smul.addr %s63, 8
    %s65 = scalar_lea.vmem %s2, %s64
    %s66 = sadd.s32 0, 0
    %p67 = scmp.lt.s32.totalorder %s66, 0
    %s68 = scalar_select %p67, %s66, 0
    %p69 = scmp.lt.s32.totalorder %s68, 0
    %s70 = scalar_select %p69, %s68, 0
    %s71 = smul.addr %s70, 8
    %s72 = scalar_lea.vmem %s0, %s71
    %s73 = sadd.s32 0, 0
    %p74 = scmp.lt.s32.totalorder %s73, 0
    %s75 = scalar_select %p74, %s73, 0
    %s76 = sadd.s32 0, 0
    %p77 = scmp.lt.s32.totalorder %s76, 0
    %s78 = scalar_select %p77, %s76, 0
    %s79 = sadd.s32 0, 0
    %p80 = scmp.lt.s32.totalorder %s79, 0
    %s81 = scalar_select %p80, %s79, 0
    %p82 = scmp.lt.s32.totalorder %s81, 0
    %s83 = scalar_select %p82, %s81, 0
    %s84 = smul.addr %s83, 8
    %s85 = scalar_lea.vmem %s2, %s84
    %s86 = sadd.s32 0, 0
    %p87 = scmp.lt.s32.totalorder %s86, 0
    %s88 = scalar_select %p87, %s86, 0
    %p89 = scmp.eq.s32.totalorder 0, 0
    // Predicated region
    $region18: #{tpu_custom_call.1} parent=1 // pred_check
      %p90 = pneg %p89
    $region19: #{tpu_custom_call.1} parent=1 // pred_check_branch
      %92 = sbr.rel (%p90) target = $region21
    $region20: #{tpu_custom_call.1} parent=1 // pred_region
      %vm93 = vcmask 0
      %94 = vst.msk [vmem:[#allocation2] sm:$0x1] %vm93, 0.0
    $region21: #{tpu_custom_call.1} parent=1 // pred_fallthru
      _
    %v95 = vld [vmem:[%s72] sm:$0xff]
    %v96 = vld [vmem:[#allocation3] sm:$0xff]
    %v97 = vsub.f32 %v95, %v96
    %v98 = vmul.f32 %v97, %v97
    %vm99 = vcmask 261120
    %v100 = vsel %vm99, %v98, 0.0
    %101 = vadd.xlane.f32.xlu0 %v100
    %v102 = vpop.xlane.xlu0 %101
    %v103 = vrsqrt.pop %v102
    %v104 = vmul.f32 %v102, %v103
    %vm105 = vcmp.eq.f32.partialorder %v102, inf
    %v106 = vsel %vm105, %v102, %v104
    %vm107 = vcmp.eq.f32.partialorder %v102, 0.0
    %v108 = vand.u32 %v102, 2147483648
    %v109 = vsel %vm107, %v108, %v106
    %v110 = vsub.f32 1.0, %v109
    %v111 = vmax.f32 %v110, 0.0
    %v112 = vld [vmem:[%s85] sm:$0xff]
    %v113 = vmul.f32 %v112, %v102
    %v114 = vsub.f32 1.0, %v112
    %v115 = vmul.f32 %v111, %v111
    %v116 = vmul.f32 %v114, %v115
    %v117 = vadd.f32 %v113, %v116
    %s118 = sadd.s32 0, 0
    %s119 = smul.u32 %s118, 8
    %v120 = vlaneseq
    %v121 = vshrl.u32 %v120, 7
    %v122 = vstv %s119
    %v123 = vadd.s32 %v122, %v121
    %vm124 = vcmp.lt.s32.totalorder %v123, 8
    %v125 = vsel %vm124, %v117, 0.0
    %v126 = vld [vmem:[#allocation2] sm:$0x1]
    %vm127 = vcmask 7168
    %v128 = vsel %vm127, %v125, 0.0
    %129 = vadd.xlane.f32.xlu0 %v128
    %v130 = vpop.xlane.xlu0 %129
    %v131 = vrot.slane %v130, 4
    %v132 = vadd.f32 %v130, %v131
    %v133 = vrot.slane %v132, 2
    %v134 = vadd.f32 %v132, %v133
    %v135 = vrot.slane %v134, 1
    %v136 = vadd.f32 %v134, %v135
    %s137 = vtos %v136
    %v138 = vstv %s137
    %v139 = vadd.f32 %v126, %v138
    %vm140 = vcmask 0
    %141 = vst.msk [vmem:[#allocation2] sm:$0x1] %vm140, %v139
    // Predicated region
    $region22: #{tpu_custom_call.1} parent=1 // pred_check
      %p142 = pneg %p89
    $region23: #{tpu_custom_call.1} parent=1 // pred_check_branch
      %144 = sbr.rel (%p142) target = $region25
    $region24: #{tpu_custom_call.1} parent=1 // pred_region
      %v145 = vld [vmem:[#allocation2] sm:$0x1]
      %v147 = vlaneseq
      %v148 = vshrl.u32 %v147, 7
      %v149 = vsub.s32 0, %v148
      %v150 = vrot.slane %v145, %v149
      %151 = vset.pattern.permute.xlu0 0
      %152 = vperm.xlu0 %151, %v150
      %v153 = vpop.permute.xlu0 %152
      %155 = vst [vmem:[#allocation6] sm:$0xff] %v153
    $region25: #{tpu_custom_call.1} parent=1 // pred_fallthru
      _
    // Predicated region
    $region26: #{tpu_custom_call.1} parent=1 // pred_check
      _
    $region27: #{tpu_custom_call.1} parent=1 // pred_check_branch
      %157 = sbr.rel (0) target = $region29
    $region28: #{tpu_custom_call.1} parent=1 // pred_region
      %s159 = ssub.s32 128, 128
      %160 = vsyncadd [#allocation5], %s159
      %s162 = sshll.u32 [#allocation6], 4
      %s163 = int_to_ptr.vmem [resolvable:$true] %s162
      %165 = dma.vmem_to_hbm [thread:$0]  %s163, 128, %s3, [#allocation5]
    $region29: #{tpu_custom_call.1} parent=1 // pred_fallthru
      _
    // Predicated region
    $region30: #{tpu_custom_call.1} parent=1 // pred_check
      _
    $region31: #{tpu_custom_call.1} parent=1 // pred_check_branch
      %167 = sbr.rel (0) target = $region33
    $region32: #{tpu_custom_call.1} parent=1 // pred_region
      %168 = dma.done [#allocation5], 128
    $region33: #{tpu_custom_call.1} parent=1 // pred_fallthru
      _
    %169 = vsyncpa [#allocation4], 1
    %170 = vsyncpa [#allocation5], 1

</llo_original>
